<compile_context>
chip_gen: v7x
topology: tpu7x:2x2x1
jax: 0.10.0
libtpu: 0.0.40
codegen_flags: <defaults>
</compile_context>

<pallas_src>
import math
import numpy as np
import jax
import jax.numpy as jnp
from jax import lax
from jax.experimental import pallas as pl
from jax.experimental.pallas import tpu as pltpu


NEG_INF = -1e30  # finite "-inf": keeps max()/exp() NaN-free even for fully-masked rows


def _round_up(x, m):
    return ((x + m - 1) // m) * m


# ----------------------------- tiled GEMM ------------------------------------

def _matmul_kernel(x_ref, w_ref, o_ref, acc_ref):
    # Accumulate over the K grid axis in an f32 VMEM scratch; write back once.
    @pl.when(pl.program_id(2) == 0)
    def _init():
        acc_ref[...] = jnp.zeros_like(acc_ref)

    # bf16 operands on the MXU, f32 accumulation.
    acc_ref[...] += jnp.dot(
        x_ref[...].astype(jnp.bfloat16),
        w_ref[...].astype(jnp.bfloat16),
        preferred_element_type=jnp.float32,
    )

    @pl.when(pl.program_id(2) == pl.num_programs(2) - 1)
    def _done():
        o_ref[...] = acc_ref[...].astype(o_ref.dtype)


def linear(x2d, w, *, out_dtype=None, tm=512, tn=512, tk=512):
    """y = x2d @ w  (x2d: (M, K), w: (K, N)) tiled + software-pipelined.

    Arbitrary M/K/N handled by zero-padding to the tile grid (zeros along K are
    exact) and slicing the result — no tiny or full-dim fallback tiles for big dims.
    """
    M, K = x2d.shape
    K2, N = w.shape
    assert K == K2
    out_dtype = out_dtype if out_dtype is not None else x2d.dtype

    bm = M if M <= tm else tm
    bn = N if N <= tn else tn
    bk = K if K <= tk else tk
    Mp, Kp, Np = _round_up(M, bm), _round_up(K, bk), _round_up(N, bn)
    if (Mp, Kp) != (M, K):
        x2d = jnp.pad(x2d, ((0, Mp - M), (0, Kp - K)))
    if (Kp, Np) != (K, N):
        w = jnp.pad(w, ((0, Kp - K), (0, Np - N)))

    grid = (Mp // bm, Np // bn, Kp // bk)
    # VMEM/step at 512 tiles (f32 x + bf16 w, double-buffered, + f32 acc) ~ 6 MiB:
    # fits the default scoped limit on v5e/v6e and well under v7x's 64 MiB VMEM.
    # TODO(synk): add pipeline_mode=pl.Buffered(3) on the K-axis specs if a bundle
    # dump still shows exposed DMA waits.
    out = pl.pallas_call(
        _matmul_kernel,
        out_shape=jax.ShapeDtypeStruct((Mp, Np), out_dtype),
        grid=grid,
        in_specs=[
            pl.BlockSpec((bm, bk), lambda i, j, k: (i, k)),
            pl.BlockSpec((bk, bn), lambda i, j, k: (k, j)),
        ],
        out_specs=pl.BlockSpec((bm, bn), lambda i, j, k: (i, j)),
        scratch_shapes=[pltpu.VMEM((bm, bn), jnp.float32)],
        compiler_params=pltpu.CompilerParams(
            dimension_semantics=("parallel", "parallel", "arbitrary"),
        ),
    )(x2d, w)
    if (Mp, Np) != (M, N):
        out = out[:M, :N]
    return out


# ----------------------------- flash attention --------------------------------

def flash_attention(q, k, v, n_rep, *, seq_tile=256):
    """Causal GQA flash attention.

    q: (B, H, S, D) bf16 (1/sqrt(D) already folded into wq)
    k, v: (B, Hk, S, D) bf16 — NOT repeated; sharing handled by the K/V index_map.
    Returns (B, Hk, S, n_rep*D): lane-dense output (heads concatenated along the
    last dim); the wrapper un-merges it before the output projection.
    """
    B, H, S, D = q.shape
    _, Hk, Sk, Dk = k.shape
    assert H == Hk * n_rep and S == Sk and D == Dk

    ts = S if S <= seq_tile else seq_tile
    Sp = _round_up(S, ts)
    if Sp != S:
        pad = ((0, 0), (0, 0), (0, Sp - S), (0, 0))
        q, k, v = jnp.pad(q, pad), jnp.pad(k, pad), jnp.pad(v, pad)
    tq = tkv = ts
    nq = nkv = Sp // ts
    rows = n_rep * tq                      # query rows processed per grid step

    def kernel(q_ref, k_ref, v_ref, o_ref, m_ref, l_ref, acc_ref):
        qi = pl.program_id(2)
        kvi = pl.program_id(3)

        @pl.when(kvi == 0)
        def _init():
            m_ref[...] = jnp.full(m_ref.shape, NEG_INF, m_ref.dtype)
            l_ref[...] = jnp.zeros_like(l_ref)
            acc_ref[...] = jnp.zeros_like(acc_ref)

        q_first = qi * tq
        q_last = q_first + (tq - 1)
        kv_first = kvi * tkv
        kv_last = kv_first + (tkv - 1)

        def scores():
            q2 = q_ref[0].reshape(rows, D)           # bf16, scale already in wq
            kb = k_ref[0, 0]                         # (tkv, D) bf16
            return lax.dot_general(                  # q2 @ kb^T (contract D), f32 acc
                q2, kb, (((1,), (1,)), ((), ())),
                preferred_element_type=jnp.float32)

        def update(s):
            m_prev = m_ref[...]                      # (rows, 1) f32
            m_new = jnp.maximum(m_prev, s.max(axis=-1, keepdims=True))
            alpha = jnp.exp(m_prev - m_new)
            p = jnp.exp(s - m_new)
            l_ref[...] = alpha * l_ref[...] + p.sum(axis=-1, keepdims=True)
            acc_ref[...] = alpha * acc_ref[...] + jnp.dot(
                p.astype(jnp.bfloat16), v_ref[0, 0],
                preferred_element_type=jnp.float32)
            m_ref[...] = m_new

        # Strictly below the diagonal: no mask math at all (pure VALU saving).
        @pl.when(kv_last <= q_first)
        def _below():
            update(scores())

        # Crossing the diagonal: apply the causal mask.
        @pl.when((kv_last > q_first) & (kv_first <= q_last))
        def _diag():
            s = scores()
            row = q_first + (lax.broadcasted_iota(jnp.int32, s.shape, 0) % tq)
            col = kv_first + lax.broadcasted_iota(jnp.int32, s.shape, 1)
            update(jnp.where(col > row, NEG_INF, s))

        @pl.when(kvi == pl.num_programs(3) - 1)
        def _finalize():
            inv = pl.reciprocal(l_ref[...], approx=True)     # EUP slot
            out = acc_ref[...] * inv                         # (rows, D) f32
            # Lane-dense store: concat the n_rep heads along lanes -> (tq, n_rep*D).
            out_ld = jnp.concatenate(
                [out[r * tq:(r + 1) * tq, :] for r in range(n_rep)], axis=-1)
            o_ref[0, 0] = out_ld.astype(o_ref.dtype)

    # q / out: one group of n_rep query heads (sharing one KV head) per grid step.
    q_spec = pl.BlockSpec((1, n_rep, tq, D), lambda b, hk, qi, kv: (b, hk, qi, 0))

    # K/V: shared KV head selected in the index_map (no repeat_kv); kv block index
    # clamped to the last causally-needed block so above-diagonal blocks repeat an
    # index and their HBM->VMEM DMA is elided (compute for them is skipped anyway).
    def kv_index(b, hk, qi, kv):
        last_needed = (qi * tq + (tq - 1)) // tkv
        return (b, hk, jnp.minimum(kv, last_needed), 0)
    kv_spec = pl.BlockSpec((1, 1, tkv, D), kv_index)

    o_spec = pl.BlockSpec((1, 1, tq, n_rep * D), lambda b, hk, qi, kv: (b, hk, qi, 0))

    out = pl.pallas_call(
        kernel,
        out_shape=jax.ShapeDtypeStruct((B, Hk, Sp, n_rep * D), q.dtype),
        grid=(B, Hk, nq, nkv),
        in_specs=[q_spec, kv_spec, kv_spec],
        out_specs=o_spec,
        scratch_shapes=[
            pltpu.VMEM((rows, 1), jnp.float32),   # m (running max)
            pltpu.VMEM((rows, 1), jnp.float32),   # l (running denom)
            pltpu.VMEM((rows, D), jnp.float32),   # acc (running numerator)
        ],
        compiler_params=pltpu.CompilerParams(
            # B * Hk * nq parallel extents keep both v7x TensorCores busy.
            dimension_semantics=("parallel", "parallel", "parallel", "arbitrary"),
        ),
    )(q, k, v)
    if Sp != S:
        out = out[:, :, :S, :]
    return out


# ----------------------------- RoPE (host-side JAX) ---------------------------

def precompute_pos_cis(seq_len, head_dim, theta=10000.0):
    """Returns (cos, sin), each (seq_len, head_dim // 2), matching the complex pos_cis."""
    freqs = 1.0 / (theta ** (jnp.arange(0, head_dim, 2, dtype=jnp.float32) / head_dim))
    t = jnp.arange(seq_len, dtype=jnp.float32)
    angles = jnp.outer(t, freqs)  # (S, D/2)
    return jnp.cos(angles), jnp.sin(angles)


def apply_rotary_emb(xq, xk, cos, sin):
    """xq: (B, S, Hq, D), xk: (B, S, Hk, D); cos/sin: (S, D/2).
    Matches torch view_as_complex on interleaved pairs.
    # TODO(synk): fuse RoPE into the flash-attention prologue (pltpu.roll form) to
    # save one HBM pass over Q/K; kept in plain JAX here for exact interleaved semantics."""
    def rot(x):
        B, S, H, D = x.shape
        xr = x.astype(jnp.float32).reshape(B, S, H, D // 2, 2)
        x0, x1 = xr[..., 0], xr[..., 1]
        c = cos[None, :, None, :]
        s = sin[None, :, None, :]
        o0 = x0 * c - x1 * s
        o1 = x0 * s + x1 * c
        out = jnp.stack([o0, o1], axis=-1).reshape(B, S, H, D)
        return out.astype(x.dtype)
    return rot(xq), rot(xk)


# ----------------------------- module wrapper ----------------------------------

class AttentionParams:
    def __init__(self, key, dim, n_heads, n_kv_heads, dtype=jnp.bfloat16):
        self.dim = dim
        self.n_heads = n_heads
        self.n_kv_heads = n_kv_heads
        self.n_rep = n_heads // n_kv_heads
        self.head_dim = dim // n_heads
        k1, k2, k3, k4 = jax.random.split(key, 4)
        scale = 1.0 / math.sqrt(dim)
        qk_scale = 1.0 / math.sqrt(self.head_dim)     # 1/sqrt(D) folded into wq
        # stored as (in, out) so y = x @ W; weights kept in bf16 for the MXU.
        self.wq = (jax.random.normal(k1, (dim, n_heads * self.head_dim)) * scale * qk_scale).astype(dtype)
        self.wk = (jax.random.normal(k2, (dim, n_kv_heads * self.head_dim)) * scale).astype(dtype)
        self.wv = (jax.random.normal(k3, (dim, n_kv_heads * self.head_dim)) * scale).astype(dtype)
        self.wo = (jax.random.normal(k4, (n_heads * self.head_dim, dim)) * scale).astype(dtype)


def attention_forward(params, x, pos_cos, pos_sin):
    """x: (B, S, dim) -> (B, S, dim). Mirrors Attention.forward with dropout=0, kv_cache=False."""
    B, S, dim = x.shape
    H, Hk, D = params.n_heads, params.n_kv_heads, params.head_dim
    n_rep = params.n_rep

    x2d = x.reshape(B * S, dim)
    xq = linear(x2d, params.wq).reshape(B, S, H, D)
    xk = linear(x2d, params.wk).reshape(B, S, Hk, D)
    xv = linear(x2d, params.wv).reshape(B, S, Hk, D)

    xq, xk = apply_rotary_emb(xq, xk, pos_cos, pos_sin)

    # (B, S, H, D) -> (B, H, S, D), cast to bf16 once (halves K/V HBM traffic).
    # TODO(synk): fold these layout transposes into the projection out_specs / an
    # attention index_map on the (B, S, H, D) layout to save extra HBM passes.
    q = jnp.transpose(xq, (0, 2, 1, 3)).astype(jnp.bfloat16)
    k = jnp.transpose(xk, (0, 2, 1, 3)).astype(jnp.bfloat16)
    v = jnp.transpose(xv, (0, 2, 1, 3)).astype(jnp.bfloat16)

    out = flash_attention(q, k, v, n_rep)              # (B, Hk, S, n_rep*D) bf16
    # Un-merge the lane-dense slab: (B, Hk, S, n_rep*D) -> (B*S, H*D), head order
    # h = hk*n_rep + r (matches repeat_kv layout in the reference module).
    out = jnp.transpose(out, (0, 2, 1, 3)).reshape(B * S, H * D)
    out = linear(out, params.wo, out_dtype=x.dtype).reshape(B, S, dim)
    return out


# ----------------------------- pure-JAX reference -------------------------------

def reference_forward(params, x, pos_cos, pos_sin):
    B, S, dim = x.shape
    H, Hk, D = params.n_heads, params.n_kv_heads, params.head_dim
    n_rep = params.n_rep
    f32 = jnp.float32
    x2d = x.reshape(B * S, dim).astype(f32)
    xq = (x2d @ params.wq.astype(f32)).reshape(B, S, H, D)
    xk = (x2d @ params.wk.astype(f32)).reshape(B, S, Hk, D)
    xv = (x2d @ params.wv.astype(f32)).reshape(B, S, Hk, D)
    xq, xk = apply_rotary_emb(xq, xk, pos_cos, pos_sin)
    xk = jnp.repeat(xk, n_rep, axis=2)
    xv = jnp.repeat(xv, n_rep, axis=2)
    q = jnp.transpose(xq, (0, 2, 1, 3))
    k = jnp.transpose(xk, (0, 2, 1, 3))
    v = jnp.transpose(xv, (0, 2, 1, 3))
    scores = jnp.einsum("bhqd,bhkd->bhqk", q, k)       # 1/sqrt(D) already in wq
    mask = jnp.triu(jnp.full((S, S), -jnp.inf, f32), k=1)
    scores = scores + mask[None, None]
    attn = jax.nn.softmax(scores, axis=-1)
    out = jnp.einsum("bhqk,bhkd->bhqd", attn, v)
    out = jnp.transpose(out, (0, 2, 1, 3)).reshape(B * S, H * D)
    return (out @ params.wo.astype(f32)).reshape(B, S, dim)


# --------------------------------- main -----------------------------------------

if __name__ == "__main__":
    # Small config implied by forward: dim=32, n_heads=4, n_kv_heads=2 -> head_dim=8
    B, S, dim = 2, 8, 32
    n_heads, n_kv_heads = 4, 2
    head_dim = dim // n_heads

    key = jax.random.PRNGKey(0)
    kp, kx = jax.random.split(key)
    params = AttentionParams(kp, dim, n_heads, n_kv_heads)
    x = jax.random.normal(kx, (B, S, dim), dtype=jnp.float32)
    pos_cos, pos_sin = precompute_pos_cis(S, head_dim)

    out = attention_forward(params, x, pos_cos, pos_sin)
    out = jax.block_until_ready(out)
    assert out.shape == (B, S, dim)

    # Loose tolerance: kernel uses bf16 MXU operands + approx reciprocal.
    ref = reference_forward(params, x, pos_cos, pos_sin)
    np.testing.assert_allclose(np.asarray(out), np.asarray(ref), rtol=0.0, atol=0.08)
    print("KERNEL_OK")
</pallas_src>

<mosaic_0001>
module attributes {stable_mosaic.version = 11 : i64} {
  func.func @_matmul_kernel(%arg0: i32, %arg1: i32, %arg2: i32, %arg3: memref<16x32xf32, #tpu.memory_space<vmem>>, %arg4: memref<32x32xbf16, #tpu.memory_space<vmem>>, %arg5: memref<16x32xf32, #tpu.memory_space<vmem>>, %arg6: memref<16x32xf32, #tpu.memory_space<vmem>>) attributes {dimension_semantics = [#tpu.dimension_semantics<parallel>, #tpu.dimension_semantics<parallel>, #tpu.dimension_semantics<arbitrary>], iteration_bounds = array<i64: 1, 1, 1>, scalar_prefetch = 0 : i64, scratch_operands = 1 : i64, tpu.core_type = #tpu.core_type<tc>, window_params = [{transform_indices = @transform_0, window_bounds = array<i64: 16, 32>}, {transform_indices = @transform_1, window_bounds = array<i64: 32, 32>}, {transform_indices = @transform_2, window_bounds = array<i64: 16, 32>}]} {
    %c0_i32 = arith.constant 0 : i32
    %0 = arith.cmpi eq, %arg2, %c0_i32 : i32
    %1 = arith.extui %0 : i1 to i32
    %c0_i32_0 = arith.constant 0 : i32
    %2 = arith.cmpi ne, %1, %c0_i32_0 : i32
    scf.if %2 {
      %cst_10 = arith.constant 0.000000e+00 : f32
      %13 = vector.broadcast %cst_10 : f32 to vector<16x32xf32>
      %c0_11 = arith.constant 0 : index
      %c0_12 = arith.constant 0 : index
      %14 = vector.load %arg6[%c0_11, %c0_12] : memref<16x32xf32, #tpu.memory_space<vmem>>, vector<16x32xf32>
      tpu.vector_store %arg6[%c0_11, %c0_12], %13 {strides = array<i32>} : memref<16x32xf32, #tpu.memory_space<vmem>>, vector<16x32xf32>,
    } else {
    }
    %c0 = arith.constant 0 : index
    %c0_1 = arith.constant 0 : index
    %3 = vector.load %arg6[%c0, %c0_1] : memref<16x32xf32, #tpu.memory_space<vmem>>, vector<16x32xf32>
    %c0_2 = arith.constant 0 : index
    %c0_3 = arith.constant 0 : index
    %4 = vector.load %arg3[%c0_2, %c0_3] : memref<16x32xf32, #tpu.memory_space<vmem>>, vector<16x32xf32>
    %5 = arith.truncf %4 : vector<16x32xf32> to vector<16x32xbf16>
    %c0_4 = arith.constant 0 : index
    %c0_5 = arith.constant 0 : index
    %6 = vector.load %arg4[%c0_4, %c0_5] : memref<32x32xbf16, #tpu.memory_space<vmem>>, vector<32x32xbf16>
    %cst = arith.constant dense<0.000000e+00> : vector<16x32xf32>
    %7 = tpu.matmul %5, %6, %cst {dimension_numbers = #tpu.dot_dimension_numbers<[1], [0], [0], [1], [0, 0, 1, 1], [], []>} : vector<16x32xbf16>, vector<32x32xbf16>, vector<16x32xf32> -> vector<16x32xf32>
    %8 = arith.addf %3, %7 : vector<16x32xf32>
    %c0_6 = arith.constant 0 : index
    %c0_7 = arith.constant 0 : index
    %9 = vector.load %arg6[%c0_6, %c0_7] : memref<16x32xf32, #tpu.memory_space<vmem>>, vector<16x32xf32>
    tpu.vector_store %arg6[%c0_6, %c0_7], %8 {strides = array<i32>} : memref<16x32xf32, #tpu.memory_space<vmem>>, vector<16x32xf32>,
    %c0_i32_8 = arith.constant 0 : i32
    %10 = arith.cmpi eq, %arg2, %c0_i32_8 : i32
    %11 = arith.extui %10 : i1 to i32
    %c0_i32_9 = arith.constant 0 : i32
    %12 = arith.cmpi ne, %11, %c0_i32_9 : i32
    scf.if %12 {
      %c0_10 = arith.constant 0 : index
      %c0_11 = arith.constant 0 : index
      %13 = vector.load %arg6[%c0_10, %c0_11] : memref<16x32xf32, #tpu.memory_space<vmem>>, vector<16x32xf32>
      %c0_12 = arith.constant 0 : index
      %c0_13 = arith.constant 0 : index
      %14 = vector.load %arg5[%c0_12, %c0_13] : memref<16x32xf32, #tpu.memory_space<vmem>>, vector<16x32xf32>
      tpu.vector_store %arg5[%c0_12, %c0_13], %13 {strides = array<i32>} : memref<16x32xf32, #tpu.memory_space<vmem>>, vector<16x32xf32>,
    } else {
    }
    return
  }
  func.func @transform_0(%arg0: i32, %arg1: i32, %arg2: i32) -> (i32, i32) {
    %c0_i32 = arith.constant 0 : i32
    return %arg0, %arg2 : i32, i32
  }
  func.func @transform_1(%arg0: i32, %arg1: i32, %arg2: i32) -> (i32, i32) {
    %c0_i32 = arith.constant 0 : i32
    return %arg2, %arg1 : i32, i32
  }
  func.func @transform_2(%arg0: i32, %arg1: i32, %arg2: i32) -> (i32, i32) {
    %c0_i32 = arith.constant 0 : i32
    return %arg0, %arg1 : i32, i32
  }
}

</mosaic_0001>

<llo_original>
// kernel: tpu_custom_call.1
$region0: #{tpu_custom_call.1}
  #allocation0 [shape = 'u32[]', space=smem, size = 0x4, offset = 0x4, fixed_abs, tag = 'smem constant byte address 0x4 - core index']
  #allocation1 [shape = 'u32[144,128]{1,0:T(1,128)}', space=vmem, size = 0x12000, scoped, tag = 'internal scratch']
  #allocation2 [shape = 'f32[16,32]{1,0:T(8,128)}', space=vmem, size = 0x2000, scoped, tag = 'scratch operand']
  %s0 = inlined_call_operand.hbm [shape: f32[16,32], index: 0, kind: input, shape index: {}]
  %s1 = inlined_call_operand.hbm [shape: bf16[32,32], index: 1, kind: input, shape index: {}]
  %s2 = inlined_call_operand.hbm [shape: f32[16,32], index: 2, kind: output, shape index: {}]
  %s3 = sld [smem:[#allocation0]]
  $region34: #{tpu_custom_call.1} parent=0
    _
  %s5 = ssub.s32 1, %s3
  %s6 = scalar_select 0, %s5, %s3
  $region1: #{tpu_custom_call.1} parent=0
    #allocation3 [shape = 'u8[8192]{0}', space=vmem, size = 0x2000, scoped, tag = 'input window, operand 0, single buffered']
    #allocation4 [shape = 's32[1]{0}', space=sflag, size = 0x4, scoped, tag = 'scoped memory for tpu_custom_call.1']
    #allocation5 [shape = 's32[1]{0}', space=sflag, size = 0x4, scoped, tag = 'scoped memory for tpu_custom_call.1']
    #allocation6 [shape = 'u8[8192]{0}', space=vmem, size = 0x2000, scoped, tag = 'input window, operand 1, single buffered']
    #allocation7 [shape = 's32[1]{0}', space=sflag, size = 0x4, scoped, tag = 'scoped memory for tpu_custom_call.1']
    #allocation8 [shape = 'u8[8192]{0}', space=vmem, size = 0x2000, scoped, tag = 'output window, operand 0, single buffered']
    %7 = vsyncpa [#allocation4], 0
    %8 = vsyncpa [#allocation7], 0
    %9 = vsyncpa [#allocation5], 0
    // Predicated region
    $region2: #{tpu_custom_call.1} parent=1 // pred_check
      _
    $region3: #{tpu_custom_call.1} parent=1 // pred_check_branch
      %11 = sbr.rel (0) target = $region5
    $region4: #{tpu_custom_call.1} parent=1 // pred_region
      %s13 = ssub.s32 256, 256
      %14 = vsyncadd [#allocation4], %s13
      %s15 = sshll.u32 [#allocation3], 4
      %s16 = int_to_ptr.vmem [resolvable:$true] %s15
      %21 = dma.hbm_to_vmem [thread:$0]  %s0, 256, %s16, [#allocation4], 128, 128, 8
    $region5: #{tpu_custom_call.1} parent=1 // pred_fallthru
      _
    // Predicated region
    $region6: #{tpu_custom_call.1} parent=1 // pred_check
      _
    $region7: #{tpu_custom_call.1} parent=1 // pred_check_branch
      %23 = sbr.rel (0) target = $region9
    $region8: #{tpu_custom_call.1} parent=1 // pred_region
      %s25 = ssub.s32 256, 256
      %26 = vsyncadd [#allocation7], %s25
      %s27 = sshll.u32 [#allocation6], 4
      %s28 = int_to_ptr.vmem [resolvable:$true] %s27
      %33 = dma.hbm_to_vmem [thread:$0]  %s1, 256, %s28, [#allocation7], 64, 64, 4
    $region9: #{tpu_custom_call.1} parent=1 // pred_fallthru
      _
    // Predicated region
    $region10: #{tpu_custom_call.1} parent=1 // pred_check
      _
    $region11: #{tpu_custom_call.1} parent=1 // pred_check_branch
      %35 = sbr.rel (0) target = $region13
    $region12: #{tpu_custom_call.1} parent=1 // pred_region
      %36 = dma.done [#allocation4], 256
    $region13: #{tpu_custom_call.1} parent=1 // pred_fallthru
      _
    // Predicated region
    $region14: #{tpu_custom_call.1} parent=1 // pred_check
      _
    $region15: #{tpu_custom_call.1} parent=1 // pred_check_branch
      %38 = sbr.rel (0) target = $region17
    $region16: #{tpu_custom_call.1} parent=1 // pred_region
      %39 = dma.done [#allocation7], 256
    $region17: #{tpu_custom_call.1} parent=1 // pred_fallthru
      _
    %p41 = scmp.eq.s32.totalorder 0, 0
    // Predicated region
    $region18: #{tpu_custom_call.1} parent=1 // pred_check
      %p42 = pneg %p41
    $region19: #{tpu_custom_call.1} parent=1 // pred_check_branch
      %44 = sbr.rel (%p42) target = $region21
    $region20: #{tpu_custom_call.1} parent=1 // pred_region
      %vm45 = vcmask 261120
      %46 = vst.msk [vmem:[#allocation2] sm:$0xff] %vm45, 0.0
      %47 = vst.msk [vmem:[#allocation2 + $0x8] sm:$0xff] %vm45, 0.0
    $region21: #{tpu_custom_call.1} parent=1 // pred_fallthru
      _
    %v48 = vld [vmem:[#allocation2] sm:$0xff]
    %v49 = vld [vmem:[#allocation2 + $0x8] sm:$0xff]
    %v50 = vld [vmem:[#allocation3] sm:$0xff]
    %v51 = vld [vmem:[#allocation3 + $0x8] sm:$0xff]
    %v52 = vpack.c.bf16 %v51, %v50
    %v53 = vld [vmem:[#allocation6] sm:$0xf]
    %v54 = vld [vmem:[#allocation6 + $0x4] sm:$0xf]
    %v55 = vld [vmem:[#allocation6 + $0x8] sm:$0xf]
    %v56 = vld [vmem:[#allocation6 + $0xc] sm:$0xf]
    %v61 = vunpack.c.l.b16 %v53
    %v62 = vunpack.c.l.b16 %v54
    %v63 = vunpack.c.l.b16 %v55
    %v64 = vunpack.c.l.b16 %v56
    %v65 = vpack.c.b16 %v62, %v61
    %v66 = vpack.c.b16 %v64, %v63
    %vm69 = vcmask 261120
    %v71 = vsel %vm69, %v52, 0
    %73 = vmatprep.subr.bf16.mxu0 0
    %74 = vmatpush1.bf16.msra.mxu0 %v65
    %75 = vmatprep.subr.bf16.mxu0 0
    %76 = vmatpush1.bf16.msra.mxu0 %v66
    %77 = vmatprep.subr.bf16.mxu0 0
    %78 = vmatpush1.bf16.msra.mxu0 0
    %79 = vmatprep.subr.bf16.mxu0 0
    %80 = vmatpush1.bf16.msra.mxu0 0
    %81 = vmatprep.subr.bf16.mxu0 0
    %82 = vmatpush1.bf16.msra.mxu0 0
    %83 = vmatprep.subr.bf16.mxu0 0
    %84 = vmatpush1.bf16.msra.mxu0 0
    %85 = vmatprep.subr.bf16.mxu0 0
    %86 = vmatpush1.bf16.msra.mxu0 0
    %87 = vmatprep.subr.bf16.mxu0 0
    %88 = vmatpush1.bf16.msra.mxu0 0
    %89 = vmatprep.subr.bf16.mxu0 0
    %90 = vmatpush1.bf16.msra.mxu0 0
    %91 = vmatprep.subr.bf16.mxu0 0
    %92 = vmatpush1.bf16.msra.mxu0 0
    %93 = vmatprep.subr.bf16.mxu0 0
    %94 = vmatpush1.bf16.msra.mxu0 0
    %95 = vmatprep.subr.bf16.mxu0 0
    %96 = vmatpush1.bf16.msra.mxu0 0
    %97 = vmatprep.subr.bf16.mxu0 0
    %98 = vmatpush1.bf16.msra.mxu0 0
    %99 = vmatprep.subr.bf16.mxu0 0
    %100 = vmatpush1.bf16.msra.mxu0 0
    %101 = vmatprep.subr.bf16.mxu0 0
    %102 = vmatpush1.bf16.msra.mxu0 0
    %103 = vmatprep.subr.bf16.mxu0 0
    %104 = vmatpush1.bf16.msra.mxu0 0
    %105 = vmatprep.mubr.bf16.mxu0 0
    %106 = vmatmul.mubr.bf16.gmra.mrb[0].mxu0 %v71
    %v107 = vpop.f32.mrb[0].mxu0
    %v108 = vadd.f32 0.0, %v107
    %v109 = vpop.f32.mrb[0].mxu0
    %v110 = vpop.f32.mrb[0].mxu0
    %v111 = vadd.f32 0.0, %v110
    %v112 = vpop.f32.mrb[0].mxu0
    %113 = vdwg.mxu0
    %v114 = vadd.f32 %v48, %v108
    %v115 = vadd.f32 %v49, %v111
    %116 = vst.msk [vmem:[#allocation2] sm:$0xff] %vm69, %v114
    %117 = vst.msk [vmem:[#allocation2 + $0x8] sm:$0xff] %vm69, %v115
    // Predicated region
    $region22: #{tpu_custom_call.1} parent=1 // pred_check
      %p118 = pneg %p41
    $region23: #{tpu_custom_call.1} parent=1 // pred_check_branch
      %120 = sbr.rel (%p118) target = $region25
    $region24: #{tpu_custom_call.1} parent=1 // pred_region
      %v121 = vld [vmem:[#allocation2] sm:$0xff]
      %v122 = vld [vmem:[#allocation2 + $0x8] sm:$0xff]
      %123 = vst.msk [vmem:[#allocation8] sm:$0xff] %vm69, %v121
      %124 = vst.msk [vmem:[#allocation8 + $0x8] sm:$0xff] %vm69, %v122
    $region25: #{tpu_custom_call.1} parent=1 // pred_fallthru
      _
    // Predicated region
    $region26: #{tpu_custom_call.1} parent=1 // pred_check
      _
    $region27: #{tpu_custom_call.1} parent=1 // pred_check_branch
      %126 = sbr.rel (0) target = $region29
    $region28: #{tpu_custom_call.1} parent=1 // pred_region
      %s128 = ssub.s32 256, 256
      %129 = vsyncadd [#allocation5], %s128
      %s130 = sshll.u32 [#allocation8], 4
      %s131 = int_to_ptr.vmem [resolvable:$true] %s130
      %136 = dma.vmem_to_hbm [thread:$0]  %s131, 256, %s2, [#allocation5], 128, 128, 8
    $region29: #{tpu_custom_call.1} parent=1 // pred_fallthru
      _
    // Predicated region
    $region30: #{tpu_custom_call.1} parent=1 // pred_check
      _
    $region31: #{tpu_custom_call.1} parent=1 // pred_check_branch
      %138 = sbr.rel (0) target = $region33
    $region32: #{tpu_custom_call.1} parent=1 // pred_region
      %139 = dma.done [#allocation5], 256
    $region33: #{tpu_custom_call.1} parent=1 // pred_fallthru
      _
    %140 = vsyncpa [#allocation4], 1
    %141 = vsyncpa [#allocation7], 1
    %142 = vsyncpa [#allocation5], 1

</llo_original>
